<compile_context>
chip_gen: v6e
topology: v6e:2x2x1
jax: 0.10.0
libtpu: 0.0.40
codegen_flags: <defaults>
</compile_context>

<pallas_src>
import math

import jax
import jax.numpy as jnp
import numpy as np
from jax.experimental import pallas as pl
from jax.experimental.pallas import tpu as pltpu


# ----------------------------------------------------------------------------
# Pallas kernels
# ----------------------------------------------------------------------------
def _layernorm(v, w, b, eps=1e-5):
    mu = jnp.mean(v, axis=-1, keepdims=True)
    xc = v - mu
    var = jnp.mean(xc * xc, axis=-1, keepdims=True)
    return xc * jax.lax.rsqrt(var + eps) * w + b


def patch_embed_kernel(p_ref, w_ref, add_ref, o_ref):
    # p_ref: (P, K) bf16 patches; w_ref: (K, E) bf16; add_ref: (P+1, E) f32
    #   add_ref row 0  = cls_token + pos_embed[0]
    #   add_ref row 1+ = pos_embed[1:] + patch bias
    # o_ref: (P+1, E) f32
    proj = jnp.dot(p_ref[...], w_ref[...],
                   preferred_element_type=jnp.float32)           # (P, E) f32
    o_ref[...] = jnp.concatenate([add_ref[0:1, :], proj + add_ref[1:, :]],
                                 axis=0)


def make_block_kernel(num_heads, dim, fuse_final_norm=False):
    hd = dim // num_heads
    bf16 = jnp.bfloat16

    def block_kernel(
        x_ref,
        ln1w_ref, ln1b_ref,
        qkvw_ref,                 # (C, 3C) bf16, q-columns pre-scaled by hd^-0.5
        projwh_ref, projb_ref,    # (nh, hd, C) bf16, (1, C) f32
        ln2w_ref, ln2b_ref,
        fc1w_ref, fc1b_ref,
        fc2w_ref, fc2b_ref,
        *refs,
    ):
        if fuse_final_norm:
            fnw_ref, fnb_ref, out_ref, normed_ref = refs
        else:
            (out_ref,) = refs

        x = x_ref[...]                                           # (N, C) f32

        # --- attention branch -------------------------------------------------
        h1 = _layernorm(x, ln1w_ref[...], ln1b_ref[...])
        qkv = jnp.dot(h1.astype(bf16), qkvw_ref[...],
                      preferred_element_type=jnp.float32)        # (N, 3C) f32

        def heads(base):
            # stack static lane slices into a head-batched (nh, N, hd) tensor
            return jnp.stack(
                [qkv[:, base + h * hd: base + (h + 1) * hd]
                 for h in range(num_heads)], axis=0)

        q = heads(0)              # scale already folded into the qkv weights
        k = heads(dim)
        v = heads(2 * dim)

        # batched score matmul: contract head_dim directly (no k.T materialized)
        s = jnp.einsum('hnd,hmd->hnm', q.astype(bf16), k.astype(bf16),
                       preferred_element_type=jnp.float32)       # (nh, N, N)
        s = s - jnp.max(s, axis=-1, keepdims=True)
        e = jnp.exp(s)
        p = e * pl.reciprocal(jnp.sum(e, axis=-1, keepdims=True), approx=True)

        o = jnp.einsum('hnm,hmd->hnd', p.astype(bf16), v.astype(bf16),
                       preferred_element_type=jnp.float32)       # (nh, N, hd)

        # head-batched output projection (proj weight pre-reshaped to (nh,hd,C)),
        # then sum over heads -> no lane concatenate.
        po = jnp.einsum('hnd,hdc->hnc', o.astype(bf16), projwh_ref[...],
                        preferred_element_type=jnp.float32)      # (nh, N, C)
        attn_out = po[0]
        for h in range(1, num_heads):
            attn_out = attn_out + po[h]
        x = x + attn_out + projb_ref[...]

        # --- MLP branch -------------------------------------------------------
        h2 = _layernorm(x, ln2w_ref[...], ln2b_ref[...])
        m = jnp.dot(h2.astype(bf16), fc1w_ref[...],
                    preferred_element_type=jnp.float32) + fc1b_ref[...]
        m = jax.nn.gelu(m, approximate=False)     # nn.GELU default (exact erf)
        y = jnp.dot(m.astype(bf16), fc2w_ref[...],
                    preferred_element_type=jnp.float32) + fc2b_ref[...]
        xo = x + y

        out_ref[...] = xo
        if fuse_final_norm:
            normed_ref[...] = _layernorm(xo, fnw_ref[...], fnb_ref[...])

    return block_kernel


# ----------------------------------------------------------------------------
# Wrappers around pallas_call
# ----------------------------------------------------------------------------
def _full_spec(shape):
    return pl.BlockSpec(shape, lambda b: (0,) * len(shape))


_VMEM_LIMIT = 48 * 1024 * 1024   # safe on v5e/v6e/v7x, above 16/32 MiB defaults


def patch_embed(patches_bf16, w_bf16, add_rows):
    # patches_bf16: (B, P, K) bf16; w_bf16: (K, E) bf16; add_rows: (P+1, E) f32
    B, P, K = patches_bf16.shape
    E = w_bf16.shape[1]
    N = P + 1
    return pl.pallas_call(
        patch_embed_kernel,
        out_shape=jax.ShapeDtypeStruct((B, N, E), jnp.float32),
        grid=(B,),
        in_specs=[
            pl.BlockSpec((None, P, K), lambda b: (b, 0, 0)),
            _full_spec((K, E)),
            _full_spec((N, E)),
        ],
        out_specs=pl.BlockSpec((None, N, E), lambda b: (b, 0, 0)),
        compiler_params=pltpu.CompilerParams(
            dimension_semantics=("parallel",),
            vmem_limit_bytes=_VMEM_LIMIT),
    )(patches_bf16, w_bf16, add_rows)


def _prep_block_params(blk, num_heads):
    """Cast matmul weights to bf16, fold the attention scale into the q-columns
    of the qkv weight, and reshape proj_w to (nh, hd, C)."""
    E = blk["qkv_w"].shape[0]
    hd = E // num_heads
    scale = hd ** (-0.5)
    qkv_w = jnp.concatenate(
        [blk["qkv_w"][:, :E] * scale, blk["qkv_w"][:, E:]], axis=1)
    return [
        blk["ln1_w"], blk["ln1_b"],
        qkv_w.astype(jnp.bfloat16),
        blk["proj_w"].reshape(num_heads, hd, E).astype(jnp.bfloat16),
        blk["proj_b"],
        blk["ln2_w"], blk["ln2_b"],
        blk["fc1_w"].astype(jnp.bfloat16), blk["fc1_b"],
        blk["fc2_w"].astype(jnp.bfloat16), blk["fc2_b"],
    ]


def transformer_block(x, plist, num_heads, final_norm_params=None):
    # x: (B, N, C) f32.  If final_norm_params is given, the final LayerNorm is
    # fused into this (last) block and the kernel emits (x_out, x_normed).
    B, N, C = x.shape
    fuse = final_norm_params is not None
    kernel = make_block_kernel(num_heads, C, fuse_final_norm=fuse)

    inputs = list(plist)
    if fuse:
        inputs += list(final_norm_params)

    in_specs = [pl.BlockSpec((None, N, C), lambda b: (b, 0, 0))]
    in_specs += [_full_spec(p.shape) for p in inputs]

    act_spec = pl.BlockSpec((None, N, C), lambda b: (b, 0, 0))
    if fuse:
        out_shape = (jax.ShapeDtypeStruct((B, N, C), jnp.float32),
                     jax.ShapeDtypeStruct((B, N, C), jnp.float32))
        out_specs = (act_spec, act_spec)
    else:
        out_shape = jax.ShapeDtypeStruct((B, N, C), jnp.float32)
        out_specs = act_spec

    # No input_output_aliases: every block output stays live in x_all.
    return pl.pallas_call(
        kernel,
        out_shape=out_shape,
        grid=(B,),
        in_specs=in_specs,
        out_specs=out_specs,
        compiler_params=pltpu.CompilerParams(
            dimension_semantics=("parallel",),
            vmem_limit_bytes=_VMEM_LIMIT),
    )(x, *inputs)


# ----------------------------------------------------------------------------
# FSRA forward (Pallas-backed)
# ----------------------------------------------------------------------------
def fsra_forward(x_nchw, params, cfg):
    """Returns (x_normed, x_all) exactly like FSRA.forward with local_feature=False."""
    B, C_in, H, W = x_nchw.shape
    p = cfg["patch_size"]
    ny, nx = H // p, W // p
    P = ny * nx

    # patch extraction (stride == patch_size, non-overlapping) — glue reshapes.
    patches = (
        x_nchw.reshape(B, C_in, ny, p, nx, p)
        .transpose(0, 2, 4, 1, 3, 5)          # (B, ny, nx, C_in, p, p)
        .reshape(B, P, C_in * p * p)
    )

    # cls-token + pos-embed rows, folded into the patch-embed kernel:
    #   row 0      = cls + pos[0]
    #   rows 1..P  = pos[1:] + patch-proj bias
    add_rows = jnp.concatenate(
        [params["cls_token"][0] + params["pos_embed"][0, :1],
         params["pos_embed"][0, 1:] + params["patch_b"]], axis=0)   # (P+1, E)

    # Pixels are cast to bf16 on the host side of the kernel: they would be
    # cast before the MXU anyway, and shipping bf16 halves the DMA traffic.
    x = patch_embed(patches.astype(jnp.bfloat16),
                    params["patch_w_mat"].astype(jnp.bfloat16),
                    add_rows)                                       # (B, P+1, E)

    x_all = []
    x_norm = None
    nblk = len(params["blocks"])
    for i, blk in enumerate(params["blocks"]):
        plist = _prep_block_params(blk, cfg["num_heads"])
        if i == nblk - 1:
            # final LayerNorm fused into the last block kernel
            x, x_norm = transformer_block(
                x, plist, cfg["num_heads"],
                final_norm_params=(params["norm_w"], params["norm_b"]))
        else:
            x = transformer_block(x, plist, cfg["num_heads"])
        x_all.append(x)

    return x_norm, x_all


# ----------------------------------------------------------------------------
# Deterministic parameter construction + pure-JAX f32 reference
# ----------------------------------------------------------------------------
def build_params(key, cfg):
    E = cfg["embed_dim"]
    C_in = cfg["in_chans"]
    p = cfg["patch_size"]
    P = (cfg["img_size"] // p) ** 2
    hidden = int(E * cfg["mlp_ratio"])

    keys = jax.random.split(key, 4 + 8 * cfg["depth"])
    ki = iter(keys)

    def nrm(k, shape, std=0.02):
        return (std * jax.random.normal(k, shape)).astype(jnp.float32)

    params = {}
    # PatchEmbed conv: weight (E, C_in, p, p), init N(0, sqrt(2/n)), bias 0.
    n = p * p * E
    conv_w = (math.sqrt(2.0 / n)
              * jax.random.normal(next(ki), (E, C_in, p, p))).astype(jnp.float32)
    params["patch_w_mat"] = conv_w.reshape(E, C_in * p * p).T   # (K, E)
    params["patch_b"] = jnp.zeros((1, E), jnp.float32)

    params["cls_token"] = nrm(next(ki), (1, 1, E))
    params["pos_embed"] = nrm(next(ki), (1, P + 1, E))

    params["blocks"] = []
    for _ in range(cfg["depth"]):
        blk = {
            "ln1_w": jnp.ones((1, E), jnp.float32),
            "ln1_b": jnp.zeros((1, E), jnp.float32),
            # qkv_bias=False (FSRA default) -> no qkv bias.
            "qkv_w": nrm(next(ki), (E, 3 * E)),
            "proj_w": nrm(next(ki), (E, E)),
            "proj_b": jnp.zeros((1, E), jnp.float32),
            "ln2_w": jnp.ones((1, E), jnp.float32),
            "ln2_b": jnp.zeros((1, E), jnp.float32),
            "fc1_w": nrm(next(ki), (E, hidden)),
            "fc1_b": jnp.zeros((1, hidden), jnp.float32),
            "fc2_w": nrm(next(ki), (hidden, E)),
            "fc2_b": jnp.zeros((1, E), jnp.float32),
        }
        next(ki); next(ki); next(ki); next(ki)   # reserved keys
        params["blocks"].append(blk)

    params["norm_w"] = jnp.ones((1, E), jnp.float32)
    params["norm_b"] = jnp.zeros((1, E), jnp.float32)
    return params


def fsra_reference(x_nchw, params, cfg):
    """Plain-JAX f32 reference, mirrors the PyTorch forward."""
    B, C_in, H, W = x_nchw.shape
    p = cfg["patch_size"]
    ny, nx = H // p, W // p
    P = ny * nx
    E = cfg["embed_dim"]
    nh = cfg["num_heads"]
    hd = E // nh

    patches = (
        x_nchw.reshape(B, C_in, ny, p, nx, p)
        .transpose(0, 2, 4, 1, 3, 5)
        .reshape(B, P, C_in * p * p)
    )
    x = patches @ params["patch_w_mat"] + params["patch_b"]
    cls = jnp.broadcast_to(params["cls_token"], (B, 1, E))
    x = jnp.concatenate([cls, x], axis=1) + params["pos_embed"]

    def ln(v, w, b):
        mu = jnp.mean(v, -1, keepdims=True)
        var = jnp.mean((v - mu) ** 2, -1, keepdims=True)
        return (v - mu) / jnp.sqrt(var + 1e-5) * w + b

    for blk in params["blocks"]:
        h1 = ln(x, blk["ln1_w"], blk["ln1_b"])
        qkv = h1 @ blk["qkv_w"]                              # (B, N, 3E)
        N = x.shape[1]
        qkv = qkv.reshape(B, N, 3, nh, hd).transpose(2, 0, 3, 1, 4)
        q, k, v = qkv[0], qkv[1], qkv[2]
        attn = (q @ jnp.swapaxes(k, -2, -1)) * (hd ** -0.5)
        attn = jax.nn.softmax(attn, axis=-1)
        a = (attn @ v).transpose(0, 2, 1, 3).reshape(B, N, E)
        x = x + (a @ blk["proj_w"] + blk["proj_b"])
        h2 = ln(x, blk["ln2_w"], blk["ln2_b"])
        m = jax.nn.gelu(h2 @ blk["fc1_w"] + blk["fc1_b"], approximate=False)
        x = x + (m @ blk["fc2_w"] + blk["fc2_b"])
    return ln(x, params["norm_w"], params["norm_b"])


# ----------------------------------------------------------------------------
if __name__ == "__main__":
    cfg = dict(
        img_size=32,
        patch_size=8,      # stride_size == patch_size (non-overlapping)
        in_chans=3,
        embed_dim=128,     # lane-dense (multiple of 128) output last dim
        depth=2,
        num_heads=4,
        mlp_ratio=4.0,
    )

    key = jax.random.PRNGKey(0)
    k_x, k_p = jax.random.split(key)
    x = jax.random.normal(
        k_x, (2, cfg["in_chans"], cfg["img_size"], cfg["img_size"]),
        dtype=jnp.float32)
    params = build_params(k_p, cfg)

    out, out_all = fsra_forward(x, params, cfg)
    out = jax.block_until_ready(out)
    out_all = [jax.block_until_ready(o) for o in out_all]

    # sanity check against pure-JAX f32 reference (kernel uses bf16 matmul
    # operands with f32 accumulation + approx reciprocal, hence the tolerance).
    ref = jax.block_until_ready(fsra_reference(x, params, cfg))
    np.testing.assert_allclose(np.asarray(out), np.asarray(ref),
                               rtol=5e-2, atol=5e-2)
    assert len(out_all) == cfg["depth"]
    P = (cfg["img_size"] // cfg["patch_size"]) ** 2
    assert out.shape == (2, P + 1, cfg["embed_dim"])

    print("KERNEL_OK")
</pallas_src>

<mosaic_0001>
module attributes {stable_mosaic.version = 11 : i64} {
  func.func @patch_embed_kernel(%arg0: i32, %arg1: memref<1x16x192xbf16, #tpu.memory_space<vmem>>, %arg2: memref<192x128xbf16, #tpu.memory_space<vmem>>, %arg3: memref<17x128xf32, #tpu.memory_space<vmem>>, %arg4: memref<1x17x128xf32, #tpu.memory_space<vmem>>) attributes {dimension_semantics = [#tpu.dimension_semantics<parallel>], iteration_bounds = array<i64: 2>, scalar_prefetch = 0 : i64, scratch_operands = 0 : i64, tpu.core_type = #tpu.core_type<tc>, window_params = [{transform_indices = @transform_0, window_bounds = array<i64: 1, 16, 192>}, {pipeline_mode = #tpu.pipeline_mode<synchronous>, transform_indices = @transform_1, window_bounds = array<i64: 192, 128>}, {pipeline_mode = #tpu.pipeline_mode<synchronous>, transform_indices = @transform_2, window_bounds = array<i64: 17, 128>}, {transform_indices = @transform_3, window_bounds = array<i64: 1, 17, 128>}]} {
    %c0 = arith.constant 0 : index
    %c0_0 = arith.constant 0 : index
    %c0_1 = arith.constant 0 : index
    %0 = vector.load %arg1[%c0, %c0_0, %c0_1] : memref<1x16x192xbf16, #tpu.memory_space<vmem>>, vector<1x16x192xbf16>
    %1 = vector.shape_cast %0 : vector<1x16x192xbf16> to vector<16x192xbf16>
    %c0_2 = arith.constant 0 : index
    %c0_3 = arith.constant 0 : index
    %2 = vector.load %arg2[%c0_2, %c0_3] : memref<192x128xbf16, #tpu.memory_space<vmem>>, vector<192x128xbf16>
    %cst = arith.constant dense<0.000000e+00> : vector<16x128xf32>
    %3 = tpu.matmul %1, %2, %cst {dimension_numbers = #tpu.dot_dimension_numbers<[1], [0], [0], [1], [0, 0, 1, 1], [], []>} : vector<16x192xbf16>, vector<192x128xbf16>, vector<16x128xf32> -> vector<16x128xf32>
    %c0_4 = arith.constant 0 : index
    %c0_5 = arith.constant 0 : index
    %4 = vector.load %arg3[%c0_4, %c0_5] : memref<17x128xf32, #tpu.memory_space<vmem>>, vector<1x128xf32>
    %c1 = arith.constant 1 : index
    %c0_6 = arith.constant 0 : index
    %5 = vector.load %arg3[%c1, %c0_6] : memref<17x128xf32, #tpu.memory_space<vmem>>, vector<16x128xf32>
    %6 = arith.addf %3, %5 : vector<16x128xf32>
    %7 = tpu.concatenate %4, %6 in 0 : vector<1x128xf32>, vector<16x128xf32> -> vector<17x128xf32>
    %c0_7 = arith.constant 0 : index
    %c0_8 = arith.constant 0 : index
    %c0_9 = arith.constant 0 : index
    %8 = vector.load %arg4[%c0_7, %c0_8, %c0_9] : memref<1x17x128xf32, #tpu.memory_space<vmem>>, vector<1x17x128xf32>
    %9 = vector.shape_cast %8 : vector<1x17x128xf32> to vector<17x128xf32>
    %10 = vector.shape_cast %7 : vector<17x128xf32> to vector<1x17x128xf32>
    tpu.vector_store %arg4[%c0_7, %c0_8, %c0_9], %10 {strides = array<i32>} : memref<1x17x128xf32, #tpu.memory_space<vmem>>, vector<1x17x128xf32>,
    return
  }
  func.func @transform_0(%arg0: i32) -> (i32, i32, i32) {
    %c0_i32 = arith.constant 0 : i32
    %c0_i32_0 = arith.constant 0 : i32
    %c0_i32_1 = arith.constant 0 : i32
    return %arg0, %c0_i32, %c0_i32_0 : i32, i32, i32
  }
  func.func @transform_1(%arg0: i32) -> (i32, i32) {
    %c0_i32 = arith.constant 0 : i32
    %c0_i32_0 = arith.constant 0 : i32
    %c0_i32_1 = arith.constant 0 : i32
    return %c0_i32, %c0_i32_0 : i32, i32
  }
  func.func @transform_2(%arg0: i32) -> (i32, i32) {
    %c0_i32 = arith.constant 0 : i32
    %c0_i32_0 = arith.constant 0 : i32
    %c0_i32_1 = arith.constant 0 : i32
    return %c0_i32, %c0_i32_0 : i32, i32
  }
  func.func @transform_3(%arg0: i32) -> (i32, i32, i32) {
    %c0_i32 = arith.constant 0 : i32
    %c0_i32_0 = arith.constant 0 : i32
    %c0_i32_1 = arith.constant 0 : i32
    return %arg0, %c0_i32, %c0_i32_0 : i32, i32, i32
  }
}

</mosaic_0001>

<llo_original>
// kernel: tpu_custom_call.1
$region0: #{tpu_custom_call.1}
  #allocation0 [shape = 'u32[]', space=smem, size = 0x4, offset = 0x4, fixed_abs, tag = 'smem constant byte address 0x4 - core index']
  #allocation1 [shape = 'u32[144,128]{1,0:T(1,128)}', space=vmem, size = 0x12000, scoped, tag = 'internal scratch']
  %s0 = inlined_call_operand.hbm [shape: bf16[2,16,192], index: 0, kind: input, shape index: {}]
  %s1 = inlined_call_operand.hbm [shape: bf16[192,128], index: 1, kind: input, shape index: {}]
  %s2 = inlined_call_operand.hbm [shape: f32[17,128], index: 2, kind: input, shape index: {}]
  %s3 = inlined_call_operand.vmem [shape: f32[2,17,128], index: 3, kind: output, shape index: {}]
  %s4 = sld [smem:[#allocation0]]
  $region57: #{tpu_custom_call.1} parent=0
    _
  %s6 = ssub.s32 1, %s4
  %s7 = scalar_select 0, %s6, %s4
  $region1: #{tpu_custom_call.1} parent=0
    #allocation2 [shape = 'u8[16384]{0}', space=vmem, size = 0x4000, scoped, tag = 'input window, operand 0']
    #allocation3 [shape = 's32[2]{0}', space=sflag, size = 0x8, scoped, tag = 'scoped memory for tpu_custom_call.1']
    #allocation4 [shape = 'u8[49152]{0}', space=vmem, size = 0xc000, scoped, tag = 'input window, operand 1, single buffered']
    #allocation5 [shape = 's32[1]{0}', space=sflag, size = 0x4, scoped, tag = 'scoped memory for tpu_custom_call.1']
    #allocation6 [shape = 'u8[12288]{0}', space=vmem, size = 0x3000, scoped, tag = 'input window, operand 2, single buffered']
    %8 = vsyncpa [#allocation3], 0
    %s9 = scalar_lea.sflag [#allocation3], 1
    %10 = vsyncpa %s9, 0
    %11 = vsyncpa [#allocation5], 0
    loop: start=0, step=1, limit=4
    $region2: #{tpu_custom_call.1} parent=1 // loop_pre_header
      _
    $region3: #{tpu_custom_call.1} parent=1 // loop_header
      %s13 = sphi 0, %s17
      %p14 = scmp.ge.s32.totalorder %s13, 4
      %s23 = sphi 0, %s25
      %s26 = sphi 0, %s23
      %s27 = sphi 0, %s26
      %s43 = sphi 0, %s27
      %s47 = sphi 0, %s47
      %s49 = sphi 0, %s47
      %s50 = sphi 0, %s49
      %s64 = sphi 0, %s50
      %s68 = sphi 0, %s68
      %s70 = sphi 0, %s68
      %s71 = sphi 0, %s70
      %s85 = sphi 0, %s71
      %s91 = sphi 0, %s93
      %s94 = sphi 0, %s91
      %s95 = sphi 0, %s94
      %s111 = sphi 0, %s95
    $region4: #{tpu_custom_call.1} parent=1 // loop_header_branch
      %16 = sbr.rel (%p14) target = $region8
    $region5: #{tpu_custom_call.1} parent=1 // loop_body
      %s18 = ssub.s32 %s13, 1
      %s19 = ssub.s32 %s13, 2
      %s20 = sadd.s32 %s13, 1
      %s21 = ssub.s32 %s13, %s20
      %p22 = scmp.eq.s32.totalorder %s21, 0
      %s24 = sadd.s32 %s23, 1
      %s25 = scalar_select %p22, %s23, %s24
      %p28 = pneg %p22
      %p29 = scmp.eq.s32.totalorder %s13, 1
      %p30 = por %p28, %p29
      %p31 = scmp.ne.s32.totalorder %s23, %s26
      %p32 = scmp.eq.s32.totalorder %s13, 0
      %p33 = por %p31, %p32
      %p34 = scmp.ne.s32.totalorder %s23, %s26
      %p35 = scmp.eq.s32.totalorder %s18, 1
      %p36 = por %p34, %p35
      %p37 = scmp.ne.s32.totalorder %s26, %s27
      %p38 = scmp.eq.s32.totalorder %s18, 0
      %p39 = por %p37, %p38
      %p40 = scmp.ne.s32.totalorder %s26, %s27
      %p41 = scmp.eq.s32.totalorder %s19, 1
      %p42 = por %p40, %p41
      %p44 = scmp.ne.s32.totalorder %s27, %s43
      %p45 = scmp.eq.s32.totalorder %s19, 0
      %p46 = por %p44, %p45
      %s48 = sadd.s32 %s47, 1
      %p51 = scmp.eq.s32.totalorder %s13, 1
      %p52 = scmp.ne.s32.totalorder %s47, %s49
      %p53 = scmp.eq.s32.totalorder %s13, 0
      %p54 = por %p52, %p53
      %p55 = scmp.ne.s32.totalorder %s47, %s49
      %p56 = scmp.eq.s32.totalorder %s18, 1
      %p57 = por %p55, %p56
      %p58 = scmp.ne.s32.totalorder %s49, %s50
      %p59 = scmp.eq.s32.totalorder %s18, 0
      %p60 = por %p58, %p59
      %p61 = scmp.ne.s32.totalorder %s49, %s50
      %p62 = scmp.eq.s32.totalorder %s19, 1
      %p63 = por %p61, %p62
      %p65 = scmp.ne.s32.totalorder %s50, %s64
      %p66 = scmp.eq.s32.totalorder %s19, 0
      %p67 = por %p65, %p66
      %s69 = sadd.s32 %s68, 1
      %p72 = scmp.eq.s32.totalorder %s13, 1
      %p73 = scmp.ne.s32.totalorder %s68, %s70
      %p74 = scmp.eq.s32.totalorder %s13, 0
      %p75 = por %p73, %p74
      %p76 = scmp.ne.s32.totalorder %s68, %s70
      %p77 = scmp.eq.s32.totalorder %s18, 1
      %p78 = por %p76, %p77
      %p79 = scmp.ne.s32.totalorder %s70, %s71
      %p80 = scmp.eq.s32.totalorder %s18, 0
      %p81 = por %p79, %p80
      %p82 = scmp.ne.s32.totalorder %s70, %s71
      %p83 = scmp.eq.s32.totalorder %s19, 1
      %p84 = por %p82, %p83
      %p86 = scmp.ne.s32.totalorder %s71, %s85
      %p87 = scmp.eq.s32.totalorder %s19, 0
      %p88 = por %p86, %p87
      %s89 = ssub.s32 %s13, %s20
      %p90 = scmp.eq.s32.totalorder %s89, 0
      %s92 = sadd.s32 %s91, 1
      %s93 = scalar_select %p90, %s91, %s92
      %p96 = pneg %p90
      %p97 = scmp.eq.s32.totalorder %s13, 1
      %p98 = por %p96, %p97
      %p99 = scmp.ne.s32.totalorder %s91, %s94
      %p100 = scmp.eq.s32.totalorder %s13, 0
      %p101 = por %p99, %p100
      %p102 = scmp.ne.s32.totalorder %s91, %s94
      %p103 = scmp.eq.s32.totalorder %s18, 1
      %p104 = por %p102, %p103
      %p105 = scmp.ne.s32.totalorder %s94, %s95
      %p106 = scmp.eq.s32.totalorder %s18, 0
      %p107 = por %p105, %p106
      %p108 = scmp.ne.s32.totalorder %s94, %s95
      %p109 = scmp.eq.s32.totalorder %s19, 1
      %p110 = por %p108, %p109
      %p112 = scmp.ne.s32.totalorder %s95, %s111
      %p113 = scmp.eq.s32.totalorder %s19, 0
      %p114 = por %p112, %p113
      %p115 = scmp.le.s32.totalorder 1, %s13
      %p116 = scmp.lt.s32.totalorder %s13, 3
      %p117 = pnand %p115, %p116
      %p118 = pneg %p117
      // Predicated region
      $region9: #{tpu_custom_call.1} parent=5 // pred_check
        _
      $region10: #{tpu_custom_call.1} parent=5 // pred_check_branch
        %120 = sbr.rel (%p117) target = $region12
      $region11: #{tpu_custom_call.1} parent=5 // pred_region
        %s121 = ssub.s32 %s13, 1
        // Predicated region
        $region13: #{tpu_custom_call.1} parent=11 // pred_check
          %p122 = pneg %p60
        $region14: #{tpu_custom_call.1} parent=11 // pred_check_branch
          %124 = sbr.rel (%p122) target = $region16
        $region15: #{tpu_custom_call.1} parent=11 // pred_region
          %s126 = ssub.s32 1536, 1536
          %127 = vsyncadd [#allocation5], %s126
          %s128 = sshll.u32 [#allocation4], 4
          %s129 = int_to_ptr.vmem [resolvable:$true] %s128
          %134 = dma.hbm_to_vmem [thread:$0]  %s1, 1536, %s129, [#allocation5], 64, 64, 4
        $region16: #{tpu_custom_call.1} parent=11 // pred_fallthru
          _
        // Predicated region
        $region17: #{tpu_custom_call.1} parent=11 // pred_check
          %p135 = pneg %p81
        $region18: #{tpu_custom_call.1} parent=11 // pred_check_branch
          %137 = sbr.rel (%p135) target = $region20
        $region19: #{tpu_custom_call.1} parent=11 // pred_region
          %s139 = ssub.s32 384, 384
          %140 = vsyncadd [#allocation5], %s139
          %s141 = sshll.u32 [#allocation6], 4
          %s142 = int_to_ptr.vmem [resolvable:$true] %s141
          %147 = dma.hbm_to_vmem [thread:$0]  %s2, 384, %s142, [#allocation5], 128, 128, 8
        $region20: #{tpu_custom_call.1} parent=11 // pred_fallthru
          _
      $region12: #{tpu_custom_call.1} parent=5 // pred_fallthru
        _
      %p148 = scmp.lt.s32.totalorder %s13, 2
      // Predicated region
      $region21: #{tpu_custom_call.1} parent=5 // pred_check
        %p149 = pneg %p148
      $region22: #{tpu_custom_call.1} parent=5 // pred_check_branch
        %151 = sbr.rel (%p149) target = $region24
      $region23: #{tpu_custom_call.1} parent=5 // pred_region
        // Predicated region
        $region25: #{tpu_custom_call.1} parent=23 // pred_check
          %p152 = pneg %p33
        $region26: #{tpu_custom_call.1} parent=23 // pred_check_branch
          %154 = sbr.rel (%p152) target = $region28
        $region27: #{tpu_custom_call.1} parent=23 // pred_region
          %s155 = sand.u32 %s23, 1
          %s156 = scalar_lea.sflag [#allocation3], %s155
          %s157 = sand.u32 %s23, 1
          %s158 = smul.addr %s157, 16
          %s159 = scalar_lea.vmem [#allocation2], %s158
          %s161 = ssub.s32 256, 256
          %162 = vsyncadd %s156, %s161
          %s163 = smul.addr %s13, 4
          %s164 = smul.addr %s163, 64
          %s165 = scalar_lea.hbm %s0, %s164
          %s166 = sshll.u32 %s159, 4
          %s167 = int_to_ptr.vmem [resolvable:$true] %s166
          %172 = dma.hbm_to_vmem [thread:$0]  %s165, 256, %s167, %s156, 128, 128, 8
        $region28: #{tpu_custom_call.1} parent=23 // pred_fallthru
          _
      $region24: #{tpu_custom_call.1} parent=5 // pred_fallthru
        _
      %p173 = scmp.le.s32.totalorder 1, %s13
      %p174 = scmp.lt.s32.totalorder %s13, 3
      %p175 = pnand %p173, %p174
      %p176 = pneg %p175
      // Predicated region
      $region29: #{tpu_custom_call.1} parent=5 // pred_check
        _
      $region30: #{tpu_custom_call.1} parent=5 // pred_check_branch
        %178 = sbr.rel (%p175) target = $region32
      $region31: #{tpu_custom_call.1} parent=5 // pred_region
        %s179 = ssub.s32 %s13, 1
        %s180 = sand.u32 %s26, 1
        %s181 = scalar_lea.sflag [#allocation3], %s180
        %s182 = sand.u32 %s26, 1
        %s183 = smul.addr %s182, 16
        %s184 = scalar_lea.vmem [#allocation2], %s183
        // Predicated region
        $region33: #{tpu_custom_call.1} parent=31 // pred_check
          %p185 = pneg %p39
        $region34: #{tpu_custom_call.1} parent=31 // pred_check_branch
          %187 = sbr.rel (%p185) target = $region36
        $region35: #{tpu_custom_call.1} parent=31 // pred_region
          %188 = dma.done %s181, 256
        $region36: #{tpu_custom_call.1} parent=31 // pred_fallthru
          _
        // Predicated region
        $region37: #{tpu_custom_call.1} parent=31 // pred_check
          %p189 = pneg %p60
        $region38: #{tpu_custom_call.1} parent=31 // pred_check_branch
          %191 = sbr.rel (%p189) target = $region40
        $region39: #{tpu_custom_call.1} parent=31 // pred_region
          %192 = dma.done [#allocation5], 1536
        $region40: #{tpu_custom_call.1} parent=31 // pred_fallthru
          _
        // Predicated region
        $region41: #{tpu_custom_call.1} parent=31 // pred_check
          %p193 = pneg %p81
        $region42: #{tpu_custom_call.1} parent=31 // pred_check_branch
          %195 = sbr.rel (%p193) target = $region44
        $region43: #{tpu_custom_call.1} parent=31 // pred_region
          %196 = dma.done [#allocation5], 384
        $region44: #{tpu_custom_call.1} parent=31 // pred_fallthru
          _
        %s197 = sand.u32 %s26, 1
        %s198 = scalar_lea.sflag [#allocation3], %s197
        %s199 = sand.u32 %s26, 1
        %s200 = smul.addr %s199, 16
        %s201 = scalar_lea.vmem [#allocation2], %s200
        %p202 = pneg %p39
        %p203 = pneg %p36
        %p204 = pneg %p60
        %p205 = pneg %p57
        %p206 = pneg %p81
        %p207 = pneg %p78
        %p208 = pneg %p107
        %p209 = pneg %p104
        %p210 = scmp.lt.s32.totalorder %s18, 1
        %s211 = scalar_select %p210, %s18, 1
        %s212 = smul.addr %s211, 3
        %s213 = smul.addr %s212, 8
        %s214 = scalar_lea.vmem %s3, %s213
        %p215 = scmp.lt.s32.totalorder %s18, 1
        %s216 = scalar_select %p215, %s18, 1
        %s217 = smul.addr %s216, 3
        %s218 = smul.addr %s217, 8
        %s219 = scalar_lea.vmem %s3, %s218
        %v221 = vld [vmem:[%s184] sm:$0xff]
        %v222 = vld [vmem:[%s184 + $0x8] sm:$0xff]
        %v223 = vld [vmem:[#allocation4] sm:$0xf]
        %v224 = vld [vmem:[#allocation4 + $0x4] sm:$0xf]
        %v225 = vld [vmem:[#allocation4 + $0x8] sm:$0xf]
        %v226 = vld [vmem:[#allocation4 + $0xc] sm:$0xf]
        %v227 = vld [vmem:[#allocation4 + $0x10] sm:$0xf]
        %v228 = vld [vmem:[#allocation4 + $0x14] sm:$0xf]
        %v229 = vld [vmem:[#allocation4 + $0x18] sm:$0xf]
        %v230 = vld [vmem:[#allocation4 + $0x1c] sm:$0xf]
        %v231 = vld [vmem:[#allocation4 + $0x20] sm:$0xf]
        %v232 = vld [vmem:[#allocation4 + $0x24] sm:$0xf]
        %v233 = vld [vmem:[#allocation4 + $0x28] sm:$0xf]
        %v234 = vld [vmem:[#allocation4 + $0x2c] sm:$0xf]
        %v235 = vld [vmem:[#allocation4 + $0x30] sm:$0xf]
        %v236 = vld [vmem:[#allocation4 + $0x34] sm:$0xf]
        %v237 = vld [vmem:[#allocation4 + $0x38] sm:$0xf]
        %v238 = vld [vmem:[#allocation4 + $0x3c] sm:$0xf]
        %v239 = vld [vmem:[#allocation4 + $0x40] sm:$0xf]
        %v240 = vld [vmem:[#allocation4 + $0x44] sm:$0xf]
        %v241 = vld [vmem:[#allocation4 + $0x48] sm:$0xf]
        %v242 = vld [vmem:[#allocation4 + $0x4c] sm:$0xf]
        %v243 = vld [vmem:[#allocation4 + $0x50] sm:$0xf]
        %v244 = vld [vmem:[#allocation4 + $0x54] sm:$0xf]
        %v245 = vld [vmem:[#allocation4 + $0x58] sm:$0xf]
        %v246 = vld [vmem:[#allocation4 + $0x5c] sm:$0xf]
        %v247 = vld [vmem:[#allocation6] sm:$0x1]
        %v248 = vld [vmem:[#allocation6 + $0x1] sm:$0xff]
        %v249 = vld [vmem:[#allocation6 + $0x9] sm:$0xff]
        %v252 = vunpack.c.l.b16 %v221
        %v253 = vunpack.c.h.b16 %v221
        %v254 = vunpack.c.l.b16 %v222
        %v255 = vunpack.c.h.b16 %v222
        %v256 = vpack.c.b16 %v254, %v252
        %v257 = vpack.c.b16 %v255, %v253
        %v283 = vunpack.c.l.b16 %v223
        %v284 = vunpack.c.l.b16 %v224
        %v285 = vunpack.c.l.b16 %v225
        %v286 = vunpack.c.l.b16 %v226
        %v287 = vunpack.c.l.b16 %v227
        %v288 = vunpack.c.l.b16 %v228
        %v289 = vunpack.c.l.b16 %v229
        %v290 = vunpack.c.l.b16 %v230
        %v291 = vunpack.c.l.b16 %v231
        %v292 = vunpack.c.l.b16 %v232
        %v293 = vunpack.c.l.b16 %v233
        %v294 = vunpack.c.l.b16 %v234
        %v295 = vunpack.c.l.b16 %v235
        %v296 = vunpack.c.l.b16 %v236
        %v297 = vunpack.c.l.b16 %v237
        %v298 = vunpack.c.l.b16 %v238
        %v299 = vunpack.c.l.b16 %v239
        %v300 = vunpack.c.l.b16 %v240
        %v301 = vunpack.c.l.b16 %v241
        %v302 = vunpack.c.l.b16 %v242
        %v303 = vunpack.c.l.b16 %v243
        %v304 = vunpack.c.l.b16 %v244
        %v305 = vunpack.c.l.b16 %v245
        %v306 = vunpack.c.l.b16 %v246
        %v307 = vpack.c.b16 %v284, %v283
        %v308 = vpack.c.b16 %v286, %v285
        %v309 = vpack.c.b16 %v288, %v287
        %v310 = vpack.c.b16 %v290, %v289
        %v311 = vpack.c.b16 %v292, %v291
        %v312 = vpack.c.b16 %v294, %v293
        %v313 = vpack.c.b16 %v296, %v295
        %v314 = vpack.c.b16 %v298, %v297
        %v315 = vpack.c.b16 %v300, %v299
        %v316 = vpack.c.b16 %v302, %v301
        %v317 = vpack.c.b16 %v304, %v303
        %v318 = vpack.c.b16 %v306, %v305
        %vm331 = vcmask 523264
        %v333 = vsel %vm331, %v257, 0
        %335 = vmatprep.subr.bf16.mxu0 0
        %336 = vmatpush1.bf16.msra.mxu0 %v314
        %337 = vmatprep.subr.bf16.mxu0 0
        %338 = vmatpush1.bf16.msra.mxu0 %v313
        %339 = vmatprep.subr.bf16.mxu0 0
        %340 = vmatpush1.bf16.msra.mxu0 %v312
        %341 = vmatprep.subr.bf16.mxu0 0
        %342 = vmatpush1.bf16.msra.mxu0 %v311
        %343 = vmatprep.subr.bf16.mxu0 0
        %344 = vmatpush1.bf16.msra.mxu0 %v310
        %345 = vmatprep.subr.bf16.mxu0 0
        %346 = vmatpush1.bf16.msra.mxu0 %v309
        %347 = vmatprep.subr.bf16.mxu0 0
        %348 = vmatpush1.bf16.msra.mxu0 %v308
        %349 = vmatprep.subr.bf16.mxu0 0
        %350 = vmatpush1.bf16.msra.mxu0 %v307
        %351 = vmatprep.subr.bf16.mxu0 0
        %352 = vmatpush2.bf16.msra.mxu0 0
        %353 = vmatprep.subr.bf16.mxu0 0
        %354 = vmatpush2.bf16.msra.mxu0 0
        %355 = vmatprep.subr.bf16.mxu0 0
        %356 = vmatpush2.bf16.msra.mxu0 0
        %357 = vmatprep.subr.bf16.mxu0 0
        %358 = vmatpush2.bf16.msra.mxu0 0
        %359 = vmatprep.subr.bf16.mxu0 0
        %360 = vmatpush2.bf16.msra.mxu0 %v318
        %361 = vmatprep.subr.bf16.mxu0 0
        %362 = vmatpush2.bf16.msra.mxu0 %v317
        %363 = vmatprep.subr.bf16.mxu0 0
        %364 = vmatpush2.bf16.msra.mxu0 %v316
        %365 = vmatprep.subr.bf16.mxu0 0
        %366 = vmatpush2.bf16.msra.mxu0 %v315
        %367 = vmatprep.mubr.bf16.mxu0 %v333
        %368 = vmatmul.mubr.bf16.gmra.mxu0 %v256
        %v369 = vpop.f32.mrf.mxu0
        %v370 = vadd.f32 %v248, %v369
        %v371 = vpop.f32.mrf.mxu0
        %v372 = vpop.f32.mrf.mxu0
        %v373 = vadd.f32 %v249, %v372
        %v374 = vpop.f32.mrf.mxu0
        %375 = vdwg.mxu0
        %vm378 = vcmask 1040384
        %v379 = vrot.slane %v370, 7
        %v380 = vrot.slane %v373, 7
        %v381 = vsel %vm378, %v379, %v380
        %v385 = vsel %vm378, %v247, %v379
        %386 = vst [vmem:[%s219] sm:$0xff] %v385
        %387 = vst [vmem:[%s219 + $0x8] sm:$0xff] %v381
        %388 = vst [vmem:[%s219 + $0x10] sm:$0x1] %v380
        %p389 = scmp.lt.s32.totalorder %s18, 1
        %s390 = scalar_select %p389, %s18, 1
        %s391 = smul.addr %s390, 3
        %s392 = smul.addr %s391, 8
        %s393 = scalar_lea.vmem %s3, %s392
        // Predicated region
        $region45: #{tpu_custom_call.1} parent=31 // pred_check
          %p394 = pneg %p104
        $region46: #{tpu_custom_call.1} parent=31 // pred_check_branch
          %396 = sbr.rel (%p394) target = $region48
        $region47: #{tpu_custom_call.1} parent=31 // pred_region
          _
        $region48: #{tpu_custom_call.1} parent=31 // pred_fallthru
          _
      $region32: #{tpu_custom_call.1} parent=5 // pred_fallthru
        _
      %p397 = scmp.le.s32.totalorder 2, %s13
      // Predicated region
      $region49: #{tpu_custom_call.1} parent=5 // pred_check
        %p398 = pneg %p397
      $region50: #{tpu_custom_call.1} parent=5 // pred_check_branch
        %400 = sbr.rel (%p398) target = $region52
      $region51: #{tpu_custom_call.1} parent=5 // pred_region
        %s401 = ssub.s32 %s13, 2
        // Predicated region
        $region53: #{tpu_custom_call.1} parent=51 // pred_check
          %p402 = pneg %p110
        $region54: #{tpu_custom_call.1} parent=51 // pred_check_branch
          %404 = sbr.rel (%p402) target = $region56
        $region55: #{tpu_custom_call.1} parent=51 // pred_region
          %p405 = scmp.lt.s32.totalorder %s19, 1
          %s406 = scalar_select %p405, %s19, 1
          %s407 = smul.addr %s406, 3
          %s408 = smul.addr %s407, 8
          %s409 = scalar_lea.vmem %s3, %s408
        $region56: #{tpu_custom_call.1} parent=51 // pred_fallthru
          _
      $region52: #{tpu_custom_call.1} parent=5 // pred_fallthru
        _
    $region6: #{tpu_custom_call.1} parent=1 // loop_footer
      %s17 = sadd.s32 1, %s13
    $region7: #{tpu_custom_call.1} parent=1 // loop_footer_branch
      %12 = sbr.rel target = $region3
    $region8: #{tpu_custom_call.1} parent=1 // loop_exit
      _
    %410 = vsyncpa [#allocation3], 1
    %s411 = scalar_lea.sflag [#allocation3], 1
    %412 = vsyncpa %s411, 1
    %413 = vsyncpa [#allocation5], 1

</llo_original>
